<compile_context>
chip_gen: v5e
topology: v5e:2x2
jax: 0.10.0
libtpu: 0.0.40
codegen_flags: <defaults>
</compile_context>

<pallas_src>
import functools

import numpy as np

import jax
import jax.numpy as jnp
from jax.experimental import pallas as pl
from jax.experimental.pallas import tpu as pltpu


_PARALLEL = pltpu.CompilerParams(dimension_semantics=("parallel",))

_TM_MAIN = 512     # row tile for the fused projection / FFN kernels
_TM_DEFORM = 256   # row tile for the deform-attn tail (bigger bf16 sampled block)


# ----------------------------------------------------------------------------
# Pallas kernels
# ----------------------------------------------------------------------------
def _proj_kernel(src_ref, pos_ref, wv_ref, bv_ref, wo_ref, bo_ref, wl_ref, bl_ref,
                 v_ref, off_ref, log_ref):
    """Fused: query = src + pos; value_proj(src); sampling_offsets(query);
    attention_logits(query).  bf16 MXU operands, f32 accumulation."""
    s = src_ref[...]                                  # (TM, d) f32
    sb = s.astype(jnp.bfloat16)
    qb = (s + pos_ref[...]).astype(jnp.bfloat16)
    v_ref[...] = (jnp.dot(sb, wv_ref[...], preferred_element_type=jnp.float32)
                  + bv_ref[...]).astype(v_ref.dtype)
    off_ref[...] = jnp.dot(qb, wo_ref[...],
                           preferred_element_type=jnp.float32) + bo_ref[...]
    log_ref[...] = jnp.dot(qb, wl_ref[...],
                           preferred_element_type=jnp.float32) + bl_ref[...]


def _proj_kernel_nopos(src_ref, wv_ref, bv_ref, wo_ref, bo_ref, wl_ref, bl_ref,
                       v_ref, off_ref, log_ref):
    s = src_ref[...]
    sb = s.astype(jnp.bfloat16)
    v_ref[...] = (jnp.dot(sb, wv_ref[...], preferred_element_type=jnp.float32)
                  + bv_ref[...]).astype(v_ref.dtype)
    off_ref[...] = jnp.dot(sb, wo_ref[...],
                           preferred_element_type=jnp.float32) + bo_ref[...]
    log_ref[...] = jnp.dot(sb, wl_ref[...],
                           preferred_element_type=jnp.float32) + bl_ref[...]


def _deform_out_kernel(logit_ref, samp_ref, res_ref, w_ref, b_ref, g_ref, be_ref,
                       o_ref, *, n_heads, head_dim):
    """Fused MSDeformAttn tail:
       per-head softmax over L*P, MXU head-expansion, weighted sum of sampled
       values, output_proj matmul, residual add, LayerNorm1.
       logit_ref: (TM, LP, H) f32, samp_ref: (TM, LP, H*Dh) bf16, res: (TM, d)."""
    tm, lp, _ = logit_ref.shape
    d = n_heads * head_dim

    # per-head softmax over the LP sampling positions (axis 1)
    l = logit_ref[...]
    l = l - jnp.max(l, axis=1, keepdims=True)
    e = jnp.exp(l)
    den = jnp.sum(e, axis=1, keepdims=True)                 # (TM, 1, H)
    p = e * pl.reciprocal(den)                              # (TM, LP, H), normalized

    # expand per-head weights across head_dim lanes with a one-hot MXU matmul
    # (no lane slices / concatenates, stays lane-dense at d lanes).
    col_head = jax.lax.broadcasted_iota(jnp.int32, (n_heads, d), 1) // head_dim
    row_head = jax.lax.broadcasted_iota(jnp.int32, (n_heads, d), 0)
    expand = (col_head == row_head).astype(jnp.bfloat16)    # (H, d) block one-hot
    pe = jnp.dot(p.reshape(tm * lp, n_heads).astype(jnp.bfloat16), expand,
                 preferred_element_type=jnp.float32).reshape(tm, lp, d)

    sv = samp_ref[...].astype(jnp.float32)                  # (TM, LP, d)
    agg = jnp.sum(pe * sv, axis=1)                          # (TM, d) lane-dense

    y = jnp.dot(agg.astype(jnp.bfloat16), w_ref[...],
                preferred_element_type=jnp.float32) + b_ref[...]
    z = res_ref[...] + y
    mu = jnp.mean(z, axis=-1, keepdims=True)
    var = jnp.mean((z - mu) ** 2, axis=-1, keepdims=True)
    o_ref[...] = (z - mu) * jax.lax.rsqrt(var + 1e-5) * g_ref[...] + be_ref[...]


def _ffn_res_ln_kernel(x_ref, w1_ref, b1_ref, w2_ref, b2_ref, g_ref, be_ref, o_ref):
    """out = LayerNorm(x + (relu(x@W1+b1))@W2+b2). Elementwise/LN math in f32.
    TODO(synk): for d_ffn >= 2048 chunk the d_ffn axis with an inner loop to
    bound the (TM, d_ffn) f32 intermediate on v7x's 64 MiB VMEM."""
    x = x_ref[...]
    h = jnp.dot(x.astype(jnp.bfloat16), w1_ref[...],
                preferred_element_type=jnp.float32) + b1_ref[...]
    h = jnp.maximum(h, 0.0)
    y = jnp.dot(h.astype(jnp.bfloat16), w2_ref[...],
                preferred_element_type=jnp.float32) + b2_ref[...]
    z = x + y
    mu = jnp.mean(z, axis=-1, keepdims=True)
    var = jnp.mean((z - mu) ** 2, axis=-1, keepdims=True)
    o_ref[...] = (z - mu) * jax.lax.rsqrt(var + 1e-5) * g_ref[...] + be_ref[...]


# ----------------------------------------------------------------------------
# Row-tiling plan: pad the query axis ONCE (per batch) so every kernel's row
# grid divides exactly -> no further pad/slice copies of big activations.
# ----------------------------------------------------------------------------
def _plan_row_tiles(S):
    if S >= _TM_MAIN:
        Sp = pl.cdiv(S, _TM_MAIN) * _TM_MAIN
        return Sp, _TM_MAIN, _TM_DEFORM
    Sp = max(8, ((S + 7) // 8) * 8)
    return Sp, Sp, Sp


# ----------------------------------------------------------------------------
# Pallas wrappers (inputs arrive already row-aligned; no padding here)
# ----------------------------------------------------------------------------
def fused_projections(src_rows, pos_rows, kp, *, tm):
    Mp, d = src_rows.shape
    n_off = kp["off_w"].shape[1]      # 2 * H * L * P
    n_log = kp["logit_w"].shape[1]    # H * L * P

    row_spec = pl.BlockSpec((tm, d), lambda i: (i, 0))
    const = lambda shape: pl.BlockSpec(shape, lambda i: (0, 0))

    if pos_rows is None:
        kern = _proj_kernel_nopos
        ins = (src_rows,)
        in_specs = [row_spec]
    else:
        kern = _proj_kernel
        ins = (src_rows, pos_rows)
        in_specs = [row_spec, row_spec]
    in_specs += [const(kp["value_w"].shape), const(kp["value_b"].shape),
                 const(kp["off_w"].shape), const(kp["off_b"].shape),
                 const(kp["logit_w"].shape), const(kp["logit_b"].shape)]

    return pl.pallas_call(
        kern,
        out_shape=(jax.ShapeDtypeStruct((Mp, d), jnp.bfloat16),
                   jax.ShapeDtypeStruct((Mp, n_off), jnp.float32),
                   jax.ShapeDtypeStruct((Mp, n_log), jnp.float32)),
        grid=(Mp // tm,),
        in_specs=in_specs,
        out_specs=(pl.BlockSpec((tm, d), lambda i: (i, 0)),
                   pl.BlockSpec((tm, n_off), lambda i: (i, 0)),
                   pl.BlockSpec((tm, n_log), lambda i: (i, 0))),
        compiler_params=_PARALLEL,
    )(*ins, kp["value_w"], kp["value_b"], kp["off_w"], kp["off_b"],
      kp["logit_w"], kp["logit_b"])


def deform_attn_ln(logits, sampled, residual, kp, *, n_heads, head_dim, tm):
    Mp, LP, H = logits.shape
    d = residual.shape[-1]
    kern = functools.partial(_deform_out_kernel, n_heads=n_heads, head_dim=head_dim)
    return pl.pallas_call(
        kern,
        out_shape=jax.ShapeDtypeStruct((Mp, d), jnp.float32),
        grid=(Mp // tm,),
        in_specs=[
            pl.BlockSpec((tm, LP, H), lambda i: (i, 0, 0)),
            pl.BlockSpec((tm, LP, d), lambda i: (i, 0, 0)),
            pl.BlockSpec((tm, d), lambda i: (i, 0)),
            pl.BlockSpec((d, d), lambda i: (0, 0)),
            pl.BlockSpec((1, d), lambda i: (0, 0)),
            pl.BlockSpec((1, d), lambda i: (0, 0)),
            pl.BlockSpec((1, d), lambda i: (0, 0)),
        ],
        out_specs=pl.BlockSpec((tm, d), lambda i: (i, 0)),
        compiler_params=_PARALLEL,
    )(logits, sampled, residual,
      kp["out_w"], kp["out_b"], kp["norm1_g"], kp["norm1_b"])


def ffn_res_ln(x, kp, *, tm):
    Mp, d = x.shape
    dff = kp["lin1_w"].shape[1]
    return pl.pallas_call(
        _ffn_res_ln_kernel,
        out_shape=jax.ShapeDtypeStruct((Mp, d), jnp.float32),
        grid=(Mp // tm,),
        in_specs=[
            pl.BlockSpec((tm, d), lambda i: (i, 0)),
            pl.BlockSpec((d, dff), lambda i: (0, 0)),
            pl.BlockSpec((1, dff), lambda i: (0, 0)),
            pl.BlockSpec((dff, d), lambda i: (0, 0)),
            pl.BlockSpec((1, d), lambda i: (0, 0)),
            pl.BlockSpec((1, d), lambda i: (0, 0)),
            pl.BlockSpec((1, d), lambda i: (0, 0)),
        ],
        out_specs=pl.BlockSpec((tm, d), lambda i: (i, 0)),
        compiler_params=_PARALLEL,
    )(x, kp["lin1_w"], kp["lin1_b"], kp["lin2_w"], kp["lin2_b"],
      kp["norm2_g"], kp["norm2_b"])


# ----------------------------------------------------------------------------
# Plain-JAX glue: bilinear grid-sample gather for MSDeformAttn
# (grid_sample semantics: bilinear, padding_mode='zeros', align_corners=False)
# Emits `sampled` directly in (N, Lq, L*P, heads*Dh) layout, in bf16.
# ----------------------------------------------------------------------------
def bilinear_sample(value, spatial_shapes, level_start_index, sampling_locations):
    """value: (N, S, heads, Dh) bf16; sampling_locations: (N, Lq, heads, L, P, 2).
    Returns (N, Lq, L*P, heads*Dh) bf16."""
    # TODO(synk): data-dependent gather kept in plain JAX; a Pallas
    # PrefetchScalarGridSpec gather fused with _deform_out_kernel would avoid
    # materializing `sampled` in HBM entirely (biggest remaining win).
    N, _, Hh, Dh = value.shape
    _, Lq, _, L, P, _ = sampling_locations.shape
    out_levels = []
    for lvl in range(L):
        Hl, Wl = spatial_shapes[lvl]
        start = level_start_index[lvl]
        v = value[:, start:start + Hl * Wl]                    # (N, HW, heads, Dh)
        loc = sampling_locations[:, :, :, lvl]                 # (N, Lq, heads, P, 2)
        loc = jnp.transpose(loc, (0, 1, 3, 2, 4))              # (N, Lq, P, heads, 2)
        x = loc[..., 0] * Wl - 0.5
        y = loc[..., 1] * Hl - 0.5
        x0 = jnp.floor(x)
        y0 = jnp.floor(y)
        dx = x - x0
        dy = y - y0
        x0i = x0.astype(jnp.int32)
        y0i = y0.astype(jnp.int32)
        acc = jnp.zeros((N, Lq, P, Hh, Dh), jnp.float32)
        for cx, cy, w in ((x0i, y0i, (1.0 - dx) * (1.0 - dy)),
                          (x0i + 1, y0i, dx * (1.0 - dy)),
                          (x0i, y0i + 1, (1.0 - dx) * dy),
                          (x0i + 1, y0i + 1, dx * dy)):
            valid = (cx >= 0) & (cx < Wl) & (cy >= 0) & (cy < Hl)
            flat = jnp.clip(cy, 0, Hl - 1) * Wl + jnp.clip(cx, 0, Wl - 1)
            idx = flat.reshape(N, Lq * P, Hh)
            g = jnp.take_along_axis(v, idx[..., None], axis=1)  # (N, Lq*P, heads, Dh)
            g = g.reshape(N, Lq, P, Hh, Dh).astype(jnp.float32)
            acc = acc + g * (w * valid.astype(jnp.float32))[..., None]
        out_levels.append(acc.astype(jnp.bfloat16))            # (N, Lq, P, heads, Dh)
    out = jnp.stack(out_levels, axis=2)                        # (N, Lq, L, P, heads, Dh)
    return out.reshape(N, Lq, L * P, Hh * Dh)


# ----------------------------------------------------------------------------
# Parameters: synthetic torch-style init + one-time kernel-ready preparation
# (bf16 weights, (1, N) f32 biases, attention-weight columns permuted so the
# projection emits logits in (L*P, H)-major order).
# ----------------------------------------------------------------------------
def init_params(key, d_model, d_ffn, n_levels, n_heads, n_points):
    ks = jax.random.split(key, 8)

    def w(k, shape, scale=0.05):
        return (scale * jax.random.normal(k, shape)).astype(jnp.float32)

    z = lambda *s: jnp.zeros(s, jnp.float32)
    o = lambda *s: jnp.ones(s, jnp.float32)
    HLP = n_heads * n_levels * n_points
    return {
        "samp_off_w": w(ks[0], (d_model, HLP * 2), 0.01),
        "samp_off_b": w(ks[1], (HLP * 2,), 0.05),
        "attn_wt_w": w(ks[2], (d_model, HLP)),
        "attn_wt_b": z(HLP),
        "value_proj_w": w(ks[3], (d_model, d_model)),
        "value_proj_b": z(d_model),
        "output_proj_w": w(ks[4], (d_model, d_model)),
        "output_proj_b": z(d_model),
        "norm1_g": o(d_model), "norm1_b": z(d_model),
        "norm2_g": o(d_model), "norm2_b": z(d_model),
        "linear1_w": w(ks[5], (d_model, d_ffn)),
        "linear1_b": z(d_ffn),
        "linear2_w": w(ks[6], (d_ffn, d_model)),
        "linear2_b": z(d_model),
    }


def prepare_params(p, n_heads, n_levels, n_points):
    """One-time (hoisted) weight prep: bf16 cast + attention-column permutation."""
    H, LP = n_heads, n_levels * n_points
    HLP = H * LP
    # original attention-weight column order is (h, l, p); permute to (l, p, h)
    perm = np.arange(HLP).reshape(H, LP).T.reshape(-1)
    bf = lambda a: jnp.asarray(a, jnp.bfloat16)
    row = lambda a: jnp.asarray(a, jnp.float32).reshape(1, -1)
    return {
        "value_w": bf(p["value_proj_w"]), "value_b": row(p["value_proj_b"]),
        "off_w": bf(p["samp_off_w"]), "off_b": row(p["samp_off_b"]),
        "logit_w": bf(p["attn_wt_w"][:, perm]), "logit_b": row(p["attn_wt_b"][perm]),
        "out_w": bf(p["output_proj_w"]), "out_b": row(p["output_proj_b"]),
        "norm1_g": row(p["norm1_g"]), "norm1_b": row(p["norm1_b"]),
        "norm2_g": row(p["norm2_g"]), "norm2_b": row(p["norm2_b"]),
        "lin1_w": bf(p["linear1_w"]), "lin1_b": row(p["linear1_b"]),
        "lin2_w": bf(p["linear2_w"]), "lin2_b": row(p["linear2_b"]),
    }


# ----------------------------------------------------------------------------
# Encoder layer forward (dropout = identity, i.e. eval mode)
# ----------------------------------------------------------------------------
def deformable_encoder_layer_forward(
    kparams,
    src,                     # (N, S, d_model)
    pos,                     # (N, S, d_model) or None
    reference_points,        # (N, S, n_levels, 2) or (..., 4)
    spatial_shapes,          # python list of (H, W) per level (static)
    level_start_index,       # python list of ints (static)
    padding_mask=None,       # (N, S) bool or None
    *,
    n_heads,
    n_levels,
    n_points,
):
    N, S, d = src.shape
    Dh = d // n_heads
    L, P = n_levels, n_points
    LP = L * P

    # Pad the query axis ONCE so N*Sp is an exact multiple of every row tile.
    Sp, tm_main, tm_def = _plan_row_tiles(S)
    if Sp != S:
        padq = ((0, 0), (0, Sp - S), (0, 0))
        src = jnp.pad(src, padq)
        if pos is not None:
            pos = jnp.pad(pos, padq)
        reference_points = jnp.pad(
            reference_points, ((0, 0), (0, Sp - S), (0, 0), (0, 0)),
            constant_values=0.5)
        if padding_mask is not None:
            padding_mask = jnp.pad(padding_mask, ((0, 0), (0, Sp - S)),
                                   constant_values=True)
    rows = N * Sp
    src_rows = src.reshape(rows, d)
    pos_rows = None if pos is None else pos.reshape(rows, d)

    # ---- fused projections: query=src+pos, value_proj, offsets, attn logits -
    value_rows, off_rows, logit_rows = fused_projections(
        src_rows, pos_rows, kparams, tm=tm_main)

    value = value_rows                                          # (rows, d) bf16
    if padding_mask is not None:
        value = jnp.where(padding_mask.reshape(rows, 1),
                          jnp.array(0, value.dtype), value)
    value = value.reshape(N, Sp, n_heads, Dh)

    offsets = off_rows.reshape(N, Sp, n_heads, L, P, 2)
    shapes_arr = jnp.asarray(spatial_shapes, dtype=jnp.float32)     # (L, 2)=(H,W)
    offset_normalizer = jnp.stack([shapes_arr[:, 1], shapes_arr[:, 0]], axis=-1)
    if reference_points.shape[-1] == 2:
        sampling_locations = (
            reference_points[:, :, None, :, None, :]
            + offsets / offset_normalizer[None, None, None, :, None, :])
    else:  # 4-d reference boxes
        sampling_locations = (
            reference_points[:, :, None, :, None, :2]
            + offsets / n_points * reference_points[:, :, None, :, None, 2:] * 0.5)

    sampled = bilinear_sample(value, spatial_shapes, level_start_index,
                              sampling_locations)               # (N, Sp, LP, d) bf16

    # logits already in (L*P, H)-major column order -> free reshape, no transpose
    logits = logit_rows.reshape(rows, LP, n_heads)
    sampled = sampled.reshape(rows, LP, d)

    # ---- fused: softmax + head expansion + weighted sum + out_proj + LN1 ----
    src1 = deform_attn_ln(logits, sampled, src_rows, kparams,
                          n_heads=n_heads, head_dim=Dh, tm=tm_def)

    # ---- fused FFN + residual + LayerNorm2 ----------------------------------
    out = ffn_res_ln(src1, kparams, tm=tm_main)

    out = out.reshape(N, Sp, d)
    if Sp != S:
        out = out[:, :S]
    return out


# ----------------------------------------------------------------------------
if __name__ == "__main__":
    d_model, d_ffn = 32, 64
    n_heads, n_levels, n_points = 4, 2, 2
    N = 2
    spatial_shapes = [(8, 8), (4, 4)]
    level_start_index = [0, 64]
    S = sum(h * w for h, w in spatial_shapes)        # 80

    key = jax.random.PRNGKey(0)
    kp, k1, k2, k3 = jax.random.split(key, 4)
    torch_params = init_params(kp, d_model, d_ffn, n_levels, n_heads, n_points)
    kparams = prepare_params(torch_params, n_heads, n_levels, n_points)

    src = jax.random.normal(k1, (N, S, d_model), jnp.float32)
    pos = jax.random.normal(k2, (N, S, d_model), jnp.float32)
    reference_points = jax.random.uniform(
        k3, (N, S, n_levels, 2), jnp.float32, 0.1, 0.9)

    out = deformable_encoder_layer_forward(
        kparams, src, pos, reference_points,
        spatial_shapes, level_start_index, None,
        n_heads=n_heads, n_levels=n_levels, n_points=n_points)
    out = jax.block_until_ready(out)
    assert out.shape == (N, S, d_model)
    assert bool(jnp.all(jnp.isfinite(out)))
    print("KERNEL_OK")
</pallas_src>

<mosaic_0001>
module attributes {stable_mosaic.version = 11 : i64} {
  func.func @_proj_kernel(%arg0: i32, %arg1: memref<80x32xf32, #tpu.memory_space<vmem>>, %arg2: memref<80x32xf32, #tpu.memory_space<vmem>>, %arg3: memref<32x32xbf16, #tpu.memory_space<vmem>>, %arg4: memref<1x32xf32, #tpu.memory_space<vmem>>, %arg5: memref<32x32xbf16, #tpu.memory_space<vmem>>, %arg6: memref<1x32xf32, #tpu.memory_space<vmem>>, %arg7: memref<32x16xbf16, #tpu.memory_space<vmem>>, %arg8: memref<1x16xf32, #tpu.memory_space<vmem>>, %arg9: memref<80x32xbf16, #tpu.memory_space<vmem>>, %arg10: memref<80x32xf32, #tpu.memory_space<vmem>>, %arg11: memref<80x16xf32, #tpu.memory_space<vmem>>) attributes {dimension_semantics = [#tpu.dimension_semantics<parallel>], iteration_bounds = array<i64: 2>, scalar_prefetch = 0 : i64, scratch_operands = 0 : i64, tpu.core_type = #tpu.core_type<tc>, window_params = [{transform_indices = @transform_0, window_bounds = array<i64: 80, 32>}, {transform_indices = @transform_1, window_bounds = array<i64: 80, 32>}, {pipeline_mode = #tpu.pipeline_mode<synchronous>, transform_indices = @transform_2, window_bounds = array<i64: 32, 32>}, {pipeline_mode = #tpu.pipeline_mode<synchronous>, transform_indices = @transform_3, window_bounds = array<i64: 1, 32>}, {pipeline_mode = #tpu.pipeline_mode<synchronous>, transform_indices = @transform_4, window_bounds = array<i64: 32, 32>}, {pipeline_mode = #tpu.pipeline_mode<synchronous>, transform_indices = @transform_5, window_bounds = array<i64: 1, 32>}, {pipeline_mode = #tpu.pipeline_mode<synchronous>, transform_indices = @transform_6, window_bounds = array<i64: 32, 16>}, {pipeline_mode = #tpu.pipeline_mode<synchronous>, transform_indices = @transform_7, window_bounds = array<i64: 1, 16>}, {transform_indices = @transform_8, window_bounds = array<i64: 80, 32>}, {transform_indices = @transform_9, window_bounds = array<i64: 80, 32>}, {transform_indices = @transform_10, window_bounds = array<i64: 80, 16>}]} {
    %c0 = arith.constant 0 : index
    %c0_0 = arith.constant 0 : index
    %0 = vector.load %arg1[%c0, %c0_0] : memref<80x32xf32, #tpu.memory_space<vmem>>, vector<80x32xf32>
    %1 = arith.truncf %0 : vector<80x32xf32> to vector<80x32xbf16>
    %c0_1 = arith.constant 0 : index
    %c0_2 = arith.constant 0 : index
    %2 = vector.load %arg2[%c0_1, %c0_2] : memref<80x32xf32, #tpu.memory_space<vmem>>, vector<80x32xf32>
    %3 = arith.addf %0, %2 : vector<80x32xf32>
    %4 = arith.truncf %3 : vector<80x32xf32> to vector<80x32xbf16>
    %c0_3 = arith.constant 0 : index
    %c0_4 = arith.constant 0 : index
    %5 = vector.load %arg3[%c0_3, %c0_4] : memref<32x32xbf16, #tpu.memory_space<vmem>>, vector<32x32xbf16>
    %cst = arith.constant dense<0.000000e+00> : vector<80x32xf32>
    %6 = tpu.matmul %1, %5, %cst {dimension_numbers = #tpu.dot_dimension_numbers<[1], [0], [0], [1], [0, 0, 1, 1], [], []>} : vector<80x32xbf16>, vector<32x32xbf16>, vector<80x32xf32> -> vector<80x32xf32>
    %c0_5 = arith.constant 0 : index
    %c0_6 = arith.constant 0 : index
    %7 = vector.load %arg4[%c0_5, %c0_6] : memref<1x32xf32, #tpu.memory_space<vmem>>, vector<1x32xf32>
    %8 = vector.broadcast %7 : vector<1x32xf32> to vector<80x32xf32>
    %9 = arith.addf %6, %8 : vector<80x32xf32>
    %10 = arith.truncf %9 : vector<80x32xf32> to vector<80x32xbf16>
    %c0_7 = arith.constant 0 : index
    %c0_8 = arith.constant 0 : index
    %11 = vector.load %arg9[%c0_7, %c0_8] : memref<80x32xbf16, #tpu.memory_space<vmem>>, vector<80x32xbf16>
    tpu.vector_store %arg9[%c0_7, %c0_8], %10 {strides = array<i32>} : memref<80x32xbf16, #tpu.memory_space<vmem>>, vector<80x32xbf16>,
    %c0_9 = arith.constant 0 : index
    %c0_10 = arith.constant 0 : index
    %12 = vector.load %arg5[%c0_9, %c0_10] : memref<32x32xbf16, #tpu.memory_space<vmem>>, vector<32x32xbf16>
    %cst_11 = arith.constant dense<0.000000e+00> : vector<80x32xf32>
    %13 = tpu.matmul %4, %12, %cst_11 {dimension_numbers = #tpu.dot_dimension_numbers<[1], [0], [0], [1], [0, 0, 1, 1], [], []>} : vector<80x32xbf16>, vector<32x32xbf16>, vector<80x32xf32> -> vector<80x32xf32>
    %c0_12 = arith.constant 0 : index
    %c0_13 = arith.constant 0 : index
    %14 = vector.load %arg6[%c0_12, %c0_13] : memref<1x32xf32, #tpu.memory_space<vmem>>, vector<1x32xf32>
    %15 = vector.broadcast %14 : vector<1x32xf32> to vector<80x32xf32>
    %16 = arith.addf %13, %15 : vector<80x32xf32>
    %c0_14 = arith.constant 0 : index
    %c0_15 = arith.constant 0 : index
    %17 = vector.load %arg10[%c0_14, %c0_15] : memref<80x32xf32, #tpu.memory_space<vmem>>, vector<80x32xf32>
    tpu.vector_store %arg10[%c0_14, %c0_15], %16 {strides = array<i32>} : memref<80x32xf32, #tpu.memory_space<vmem>>, vector<80x32xf32>,
    %c0_16 = arith.constant 0 : index
    %c0_17 = arith.constant 0 : index
    %18 = vector.load %arg7[%c0_16, %c0_17] : memref<32x16xbf16, #tpu.memory_space<vmem>>, vector<32x16xbf16>
    %cst_18 = arith.constant dense<0.000000e+00> : vector<80x16xf32>
    %19 = tpu.matmul %4, %18, %cst_18 {dimension_numbers = #tpu.dot_dimension_numbers<[1], [0], [0], [1], [0, 0, 1, 1], [], []>} : vector<80x32xbf16>, vector<32x16xbf16>, vector<80x16xf32> -> vector<80x16xf32>
    %c0_19 = arith.constant 0 : index
    %c0_20 = arith.constant 0 : index
    %20 = vector.load %arg8[%c0_19, %c0_20] : memref<1x16xf32, #tpu.memory_space<vmem>>, vector<1x16xf32>
    %21 = vector.broadcast %20 : vector<1x16xf32> to vector<80x16xf32>
    %22 = arith.addf %19, %21 : vector<80x16xf32>
    %c0_21 = arith.constant 0 : index
    %c0_22 = arith.constant 0 : index
    %23 = vector.load %arg11[%c0_21, %c0_22] : memref<80x16xf32, #tpu.memory_space<vmem>>, vector<80x16xf32>
    tpu.vector_store %arg11[%c0_21, %c0_22], %22 {strides = array<i32>} : memref<80x16xf32, #tpu.memory_space<vmem>>, vector<80x16xf32>,
    return
  }
  func.func @transform_0(%arg0: i32) -> (i32, i32) {
    %c0_i32 = arith.constant 0 : i32
    %c0_i32_0 = arith.constant 0 : i32
    return %arg0, %c0_i32 : i32, i32
  }
  func.func @transform_1(%arg0: i32) -> (i32, i32) {
    %c0_i32 = arith.constant 0 : i32
    %c0_i32_0 = arith.constant 0 : i32
    return %arg0, %c0_i32 : i32, i32
  }
  func.func @transform_2(%arg0: i32) -> (i32, i32) {
    %c0_i32 = arith.constant 0 : i32
    %c0_i32_0 = arith.constant 0 : i32
    %c0_i32_1 = arith.constant 0 : i32
    return %c0_i32, %c0_i32_0 : i32, i32
  }
  func.func @transform_3(%arg0: i32) -> (i32, i32) {
    %c0_i32 = arith.constant 0 : i32
    %c0_i32_0 = arith.constant 0 : i32
    %c0_i32_1 = arith.constant 0 : i32
    return %c0_i32, %c0_i32_0 : i32, i32
  }
  func.func @transform_4(%arg0: i32) -> (i32, i32) {
    %c0_i32 = arith.constant 0 : i32
    %c0_i32_0 = arith.constant 0 : i32
    %c0_i32_1 = arith.constant 0 : i32
    return %c0_i32, %c0_i32_0 : i32, i32
  }
  func.func @transform_5(%arg0: i32) -> (i32, i32) {
    %c0_i32 = arith.constant 0 : i32
    %c0_i32_0 = arith.constant 0 : i32
    %c0_i32_1 = arith.constant 0 : i32
    return %c0_i32, %c0_i32_0 : i32, i32
  }
  func.func @transform_6(%arg0: i32) -> (i32, i32) {
    %c0_i32 = arith.constant 0 : i32
    %c0_i32_0 = arith.constant 0 : i32
    %c0_i32_1 = arith.constant 0 : i32
    return %c0_i32, %c0_i32_0 : i32, i32
  }
  func.func @transform_7(%arg0: i32) -> (i32, i32) {
    %c0_i32 = arith.constant 0 : i32
    %c0_i32_0 = arith.constant 0 : i32
    %c0_i32_1 = arith.constant 0 : i32
    return %c0_i32, %c0_i32_0 : i32, i32
  }
  func.func @transform_8(%arg0: i32) -> (i32, i32) {
    %c0_i32 = arith.constant 0 : i32
    %c0_i32_0 = arith.constant 0 : i32
    return %arg0, %c0_i32 : i32, i32
  }
  func.func @transform_9(%arg0: i32) -> (i32, i32) {
    %c0_i32 = arith.constant 0 : i32
    %c0_i32_0 = arith.constant 0 : i32
    return %arg0, %c0_i32 : i32, i32
  }
  func.func @transform_10(%arg0: i32) -> (i32, i32) {
    %c0_i32 = arith.constant 0 : i32
    %c0_i32_0 = arith.constant 0 : i32
    return %arg0, %c0_i32 : i32, i32
  }
}

</mosaic_0001>

<llo_original>
// kernel: tpu_custom_call.1
$region0: #{tpu_custom_call.1}
  #allocation0 [shape = 'u32[]', space=smem, size = 0x4, offset = 0x4, fixed_abs, tag = 'smem constant byte address 0x4 - core index']
  #allocation1 [shape = 'u32[72,128]{1,0:T(1,128)}', space=vmem, size = 0x9000, scoped, tag = 'internal scratch']
  %s0 = inlined_call_operand.vmem [shape: f32[160,32], index: 0, kind: input, shape index: {}]
  %s1 = inlined_call_operand.vmem [shape: f32[160,32], index: 1, kind: input, shape index: {}]
  %s2 = inlined_call_operand.vmem [shape: bf16[32,32], index: 2, kind: input, shape index: {}]
  %s3 = inlined_call_operand.vmem [shape: f32[1,32], index: 3, kind: input, shape index: {}]
  %s4 = inlined_call_operand.vmem [shape: bf16[32,32], index: 4, kind: input, shape index: {}]
  %s5 = inlined_call_operand.vmem [shape: f32[1,32], index: 5, kind: input, shape index: {}]
  %s6 = inlined_call_operand.vmem [shape: bf16[32,16], index: 6, kind: input, shape index: {}]
  %s7 = inlined_call_operand.vmem [shape: f32[1,16], index: 7, kind: input, shape index: {}]
  %s8 = inlined_call_operand.vmem [shape: bf16[160,32], index: 8, kind: output, shape index: {0}]
  %s9 = inlined_call_operand.vmem [shape: f32[160,32], index: 9, kind: output, shape index: {1}]
  %s10 = inlined_call_operand.vmem [shape: f32[160,16], index: 10, kind: output, shape index: {2}]
  %11 = xla_tuple %s8, %s9, %s10
  %s12 = sld [smem:[#allocation0]]
  $region81: #{tpu_custom_call.1} parent=0
    _
  %s14 = ssub.s32 1, %s12
  %s15 = scalar_select 0, %s14, %s12
  loop: start=0, step=1, limit=4
  $region2: #{tpu_custom_call.1} parent=0 // loop_pre_header
    _
  $region3: #{tpu_custom_call.1} parent=0 // loop_header
    %s17 = sphi 0, %s21
    %p18 = scmp.ge.s32.totalorder %s17, 4
    %s27 = sphi 0, %s29
    %s30 = sphi 0, %s27
    %s31 = sphi 0, %s30
    %s47 = sphi 0, %s31
    %s53 = sphi 0, %s55
    %s56 = sphi 0, %s53
    %s57 = sphi 0, %s56
    %s73 = sphi 0, %s57
    %s77 = sphi 0, %s77
    %s79 = sphi 0, %s77
    %s80 = sphi 0, %s79
    %s94 = sphi 0, %s80
    %s98 = sphi 0, %s98
    %s100 = sphi 0, %s98
    %s101 = sphi 0, %s100
    %s115 = sphi 0, %s101
    %s119 = sphi 0, %s119
    %s121 = sphi 0, %s119
    %s122 = sphi 0, %s121
    %s136 = sphi 0, %s122
    %s140 = sphi 0, %s140
    %s142 = sphi 0, %s140
    %s143 = sphi 0, %s142
    %s157 = sphi 0, %s143
    %s161 = sphi 0, %s161
    %s163 = sphi 0, %s161
    %s164 = sphi 0, %s163
    %s178 = sphi 0, %s164
    %s182 = sphi 0, %s182
    %s184 = sphi 0, %s182
    %s185 = sphi 0, %s184
    %s199 = sphi 0, %s185
    %s205 = sphi 0, %s207
    %s208 = sphi 0, %s205
    %s209 = sphi 0, %s208
    %s225 = sphi 0, %s209
    %s231 = sphi 0, %s233
    %s234 = sphi 0, %s231
    %s235 = sphi 0, %s234
    %s251 = sphi 0, %s235
    %s257 = sphi 0, %s259
    %s260 = sphi 0, %s257
    %s261 = sphi 0, %s260
    %s277 = sphi 0, %s261
  $region4: #{tpu_custom_call.1} parent=0 // loop_header_branch
    %20 = sbr.rel (%p18) target = $region8
  $region5: #{tpu_custom_call.1} parent=0 // loop_body
    %s22 = ssub.s32 %s17, 1
    %s23 = ssub.s32 %s17, 2
    %s24 = sadd.s32 %s17, 1
    %s25 = ssub.s32 %s17, %s24
    %p26 = scmp.eq.s32.totalorder %s25, 0
    %s28 = sadd.s32 %s27, 1
    %s29 = scalar_select %p26, %s27, %s28
    %p32 = pneg %p26
    %p33 = scmp.eq.s32.totalorder %s17, 1
    %p34 = por %p32, %p33
    %p35 = scmp.ne.s32.totalorder %s27, %s30
    %p36 = scmp.eq.s32.totalorder %s17, 0
    %p37 = por %p35, %p36
    %p38 = scmp.ne.s32.totalorder %s27, %s30
    %p39 = scmp.eq.s32.totalorder %s22, 1
    %p40 = por %p38, %p39
    %p41 = scmp.ne.s32.totalorder %s30, %s31
    %p42 = scmp.eq.s32.totalorder %s22, 0
    %p43 = por %p41, %p42
    %p44 = scmp.ne.s32.totalorder %s30, %s31
    %p45 = scmp.eq.s32.totalorder %s23, 1
    %p46 = por %p44, %p45
    %p48 = scmp.ne.s32.totalorder %s31, %s47
    %p49 = scmp.eq.s32.totalorder %s23, 0
    %p50 = por %p48, %p49
    %s51 = ssub.s32 %s17, %s24
    %p52 = scmp.eq.s32.totalorder %s51, 0
    %s54 = sadd.s32 %s53, 1
    %s55 = scalar_select %p52, %s53, %s54
    %p58 = pneg %p52
    %p59 = scmp.eq.s32.totalorder %s17, 1
    %p60 = por %p58, %p59
    %p61 = scmp.ne.s32.totalorder %s53, %s56
    %p62 = scmp.eq.s32.totalorder %s17, 0
    %p63 = por %p61, %p62
    %p64 = scmp.ne.s32.totalorder %s53, %s56
    %p65 = scmp.eq.s32.totalorder %s22, 1
    %p66 = por %p64, %p65
    %p67 = scmp.ne.s32.totalorder %s56, %s57
    %p68 = scmp.eq.s32.totalorder %s22, 0
    %p69 = por %p67, %p68
    %p70 = scmp.ne.s32.totalorder %s56, %s57
    %p71 = scmp.eq.s32.totalorder %s23, 1
    %p72 = por %p70, %p71
    %p74 = scmp.ne.s32.totalorder %s57, %s73
    %p75 = scmp.eq.s32.totalorder %s23, 0
    %p76 = por %p74, %p75
    %s78 = sadd.s32 %s77, 1
    %p81 = scmp.eq.s32.totalorder %s17, 1
    %p82 = scmp.ne.s32.totalorder %s77, %s79
    %p83 = scmp.eq.s32.totalorder %s17, 0
    %p84 = por %p82, %p83
    %p85 = scmp.ne.s32.totalorder %s77, %s79
    %p86 = scmp.eq.s32.totalorder %s22, 1
    %p87 = por %p85, %p86
    %p88 = scmp.ne.s32.totalorder %s79, %s80
    %p89 = scmp.eq.s32.totalorder %s22, 0
    %p90 = por %p88, %p89
    %p91 = scmp.ne.s32.totalorder %s79, %s80
    %p92 = scmp.eq.s32.totalorder %s23, 1
    %p93 = por %p91, %p92
    %p95 = scmp.ne.s32.totalorder %s80, %s94
    %p96 = scmp.eq.s32.totalorder %s23, 0
    %p97 = por %p95, %p96
    %s99 = sadd.s32 %s98, 1
    %p102 = scmp.eq.s32.totalorder %s17, 1
    %p103 = scmp.ne.s32.totalorder %s98, %s100
    %p104 = scmp.eq.s32.totalorder %s17, 0
    %p105 = por %p103, %p104
    %p106 = scmp.ne.s32.totalorder %s98, %s100
    %p107 = scmp.eq.s32.totalorder %s22, 1
    %p108 = por %p106, %p107
    %p109 = scmp.ne.s32.totalorder %s100, %s101
    %p110 = scmp.eq.s32.totalorder %s22, 0
    %p111 = por %p109, %p110
    %p112 = scmp.ne.s32.totalorder %s100, %s101
    %p113 = scmp.eq.s32.totalorder %s23, 1
    %p114 = por %p112, %p113
    %p116 = scmp.ne.s32.totalorder %s101, %s115
    %p117 = scmp.eq.s32.totalorder %s23, 0
    %p118 = por %p116, %p117
    %s120 = sadd.s32 %s119, 1
    %p123 = scmp.eq.s32.totalorder %s17, 1
    %p124 = scmp.ne.s32.totalorder %s119, %s121
    %p125 = scmp.eq.s32.totalorder %s17, 0
    %p126 = por %p124, %p125
    %p127 = scmp.ne.s32.totalorder %s119, %s121
    %p128 = scmp.eq.s32.totalorder %s22, 1
    %p129 = por %p127, %p128
    %p130 = scmp.ne.s32.totalorder %s121, %s122
    %p131 = scmp.eq.s32.totalorder %s22, 0
    %p132 = por %p130, %p131
    %p133 = scmp.ne.s32.totalorder %s121, %s122
    %p134 = scmp.eq.s32.totalorder %s23, 1
    %p135 = por %p133, %p134
    %p137 = scmp.ne.s32.totalorder %s122, %s136
    %p138 = scmp.eq.s32.totalorder %s23, 0
    %p139 = por %p137, %p138
    %s141 = sadd.s32 %s140, 1
    %p144 = scmp.eq.s32.totalorder %s17, 1
    %p145 = scmp.ne.s32.totalorder %s140, %s142
    %p146 = scmp.eq.s32.totalorder %s17, 0
    %p147 = por %p145, %p146
    %p148 = scmp.ne.s32.totalorder %s140, %s142
    %p149 = scmp.eq.s32.totalorder %s22, 1
    %p150 = por %p148, %p149
    %p151 = scmp.ne.s32.totalorder %s142, %s143
    %p152 = scmp.eq.s32.totalorder %s22, 0
    %p153 = por %p151, %p152
    %p154 = scmp.ne.s32.totalorder %s142, %s143
    %p155 = scmp.eq.s32.totalorder %s23, 1
    %p156 = por %p154, %p155
    %p158 = scmp.ne.s32.totalorder %s143, %s157
    %p159 = scmp.eq.s32.totalorder %s23, 0
    %p160 = por %p158, %p159
    %s162 = sadd.s32 %s161, 1
    %p165 = scmp.eq.s32.totalorder %s17, 1
    %p166 = scmp.ne.s32.totalorder %s161, %s163
    %p167 = scmp.eq.s32.totalorder %s17, 0
    %p168 = por %p166, %p167
    %p169 = scmp.ne.s32.totalorder %s161, %s163
    %p170 = scmp.eq.s32.totalorder %s22, 1
    %p171 = por %p169, %p170
    %p172 = scmp.ne.s32.totalorder %s163, %s164
    %p173 = scmp.eq.s32.totalorder %s22, 0
    %p174 = por %p172, %p173
    %p175 = scmp.ne.s32.totalorder %s163, %s164
    %p176 = scmp.eq.s32.totalorder %s23, 1
    %p177 = por %p175, %p176
    %p179 = scmp.ne.s32.totalorder %s164, %s178
    %p180 = scmp.eq.s32.totalorder %s23, 0
    %p181 = por %p179, %p180
    %s183 = sadd.s32 %s182, 1
    %p186 = scmp.eq.s32.totalorder %s17, 1
    %p187 = scmp.ne.s32.totalorder %s182, %s184
    %p188 = scmp.eq.s32.totalorder %s17, 0
    %p189 = por %p187, %p188
    %p190 = scmp.ne.s32.totalorder %s182, %s184
    %p191 = scmp.eq.s32.totalorder %s22, 1
    %p192 = por %p190, %p191
    %p193 = scmp.ne.s32.totalorder %s184, %s185
    %p194 = scmp.eq.s32.totalorder %s22, 0
    %p195 = por %p193, %p194
    %p196 = scmp.ne.s32.totalorder %s184, %s185
    %p197 = scmp.eq.s32.totalorder %s23, 1
    %p198 = por %p196, %p197
    %p200 = scmp.ne.s32.totalorder %s185, %s199
    %p201 = scmp.eq.s32.totalorder %s23, 0
    %p202 = por %p200, %p201
    %s203 = ssub.s32 %s17, %s24
    %p204 = scmp.eq.s32.totalorder %s203, 0
    %s206 = sadd.s32 %s205, 1
    %s207 = scalar_select %p204, %s205, %s206
    %p210 = pneg %p204
    %p211 = scmp.eq.s32.totalorder %s17, 1
    %p212 = por %p210, %p211
    %p213 = scmp.ne.s32.totalorder %s205, %s208
    %p214 = scmp.eq.s32.totalorder %s17, 0
    %p215 = por %p213, %p214
    %p216 = scmp.ne.s32.totalorder %s205, %s208
    %p217 = scmp.eq.s32.totalorder %s22, 1
    %p218 = por %p216, %p217
    %p219 = scmp.ne.s32.totalorder %s208, %s209
    %p220 = scmp.eq.s32.totalorder %s22, 0
    %p221 = por %p219, %p220
    %p222 = scmp.ne.s32.totalorder %s208, %s209
    %p223 = scmp.eq.s32.totalorder %s23, 1
    %p224 = por %p222, %p223
    %p226 = scmp.ne.s32.totalorder %s209, %s225
    %p227 = scmp.eq.s32.totalorder %s23, 0
    %p228 = por %p226, %p227
    %s229 = ssub.s32 %s17, %s24
    %p230 = scmp.eq.s32.totalorder %s229, 0
    %s232 = sadd.s32 %s231, 1
    %s233 = scalar_select %p230, %s231, %s232
    %p236 = pneg %p230
    %p237 = scmp.eq.s32.totalorder %s17, 1
    %p238 = por %p236, %p237
    %p239 = scmp.ne.s32.totalorder %s231, %s234
    %p240 = scmp.eq.s32.totalorder %s17, 0
    %p241 = por %p239, %p240
    %p242 = scmp.ne.s32.totalorder %s231, %s234
    %p243 = scmp.eq.s32.totalorder %s22, 1
    %p244 = por %p242, %p243
    %p245 = scmp.ne.s32.totalorder %s234, %s235
    %p246 = scmp.eq.s32.totalorder %s22, 0
    %p247 = por %p245, %p246
    %p248 = scmp.ne.s32.totalorder %s234, %s235
    %p249 = scmp.eq.s32.totalorder %s23, 1
    %p250 = por %p248, %p249
    %p252 = scmp.ne.s32.totalorder %s235, %s251
    %p253 = scmp.eq.s32.totalorder %s23, 0
    %p254 = por %p252, %p253
    %s255 = ssub.s32 %s17, %s24
    %p256 = scmp.eq.s32.totalorder %s255, 0
    %s258 = sadd.s32 %s257, 1
    %s259 = scalar_select %p256, %s257, %s258
    %p262 = pneg %p256
    %p263 = scmp.eq.s32.totalorder %s17, 1
    %p264 = por %p262, %p263
    %p265 = scmp.ne.s32.totalorder %s257, %s260
    %p266 = scmp.eq.s32.totalorder %s17, 0
    %p267 = por %p265, %p266
    %p268 = scmp.ne.s32.totalorder %s257, %s260
    %p269 = scmp.eq.s32.totalorder %s22, 1
    %p270 = por %p268, %p269
    %p271 = scmp.ne.s32.totalorder %s260, %s261
    %p272 = scmp.eq.s32.totalorder %s22, 0
    %p273 = por %p271, %p272
    %p274 = scmp.ne.s32.totalorder %s260, %s261
    %p275 = scmp.eq.s32.totalorder %s23, 1
    %p276 = por %p274, %p275
    %p278 = scmp.ne.s32.totalorder %s261, %s277
    %p279 = scmp.eq.s32.totalorder %s23, 0
    %p280 = por %p278, %p279
    %p281 = scmp.le.s32.totalorder 1, %s17
    %p282 = scmp.lt.s32.totalorder %s17, 3
    %p283 = pnand %p281, %p282
    %p284 = pneg %p283
    // Predicated region
    $region9: #{tpu_custom_call.1} parent=5 // pred_check
      _
    $region10: #{tpu_custom_call.1} parent=5 // pred_check_branch
      %286 = sbr.rel (%p283) target = $region12
    $region11: #{tpu_custom_call.1} parent=5 // pred_region
      %s287 = ssub.s32 %s17, 1
      // Predicated region
      $region13: #{tpu_custom_call.1} parent=11 // pred_check
        %p288 = pneg %p90
      $region14: #{tpu_custom_call.1} parent=11 // pred_check_branch
        %290 = sbr.rel (%p288) target = $region16
      $region15: #{tpu_custom_call.1} parent=11 // pred_region
        _
      $region16: #{tpu_custom_call.1} parent=11 // pred_fallthru
        _
      // Predicated region
      $region17: #{tpu_custom_call.1} parent=11 // pred_check
        %p291 = pneg %p111
      $region18: #{tpu_custom_call.1} parent=11 // pred_check_branch
        %293 = sbr.rel (%p291) target = $region20
      $region19: #{tpu_custom_call.1} parent=11 // pred_region
        _
      $region20: #{tpu_custom_call.1} parent=11 // pred_fallthru
        _
      // Predicated region
      $region21: #{tpu_custom_call.1} parent=11 // pred_check
        %p294 = pneg %p132
      $region22: #{tpu_custom_call.1} parent=11 // pred_check_branch
        %296 = sbr.rel (%p294) target = $region24
      $region23: #{tpu_custom_call.1} parent=11 // pred_region
        _
      $region24: #{tpu_custom_call.1} parent=11 // pred_fallthru
        _
      // Predicated region
      $region25: #{tpu_custom_call.1} parent=11 // pred_check
        %p297 = pneg %p153
      $region26: #{tpu_custom_call.1} parent=11 // pred_check_branch
        %299 = sbr.rel (%p297) target = $region28
      $region27: #{tpu_custom_call.1} parent=11 // pred_region
        _
      $region28: #{tpu_custom_call.1} parent=11 // pred_fallthru
        _
      // Predicated region
      $region29: #{tpu_custom_call.1} parent=11 // pred_check
        %p300 = pneg %p174
      $region30: #{tpu_custom_call.1} parent=11 // pred_check_branch
        %302 = sbr.rel (%p300) target = $region32
      $region31: #{tpu_custom_call.1} parent=11 // pred_region
        _
      $region32: #{tpu_custom_call.1} parent=11 // pred_fallthru
        _
      // Predicated region
      $region33: #{tpu_custom_call.1} parent=11 // pred_check
        %p303 = pneg %p195
      $region34: #{tpu_custom_call.1} parent=11 // pred_check_branch
        %305 = sbr.rel (%p303) target = $region36
      $region35: #{tpu_custom_call.1} parent=11 // pred_region
        _
      $region36: #{tpu_custom_call.1} parent=11 // pred_fallthru
        _
    $region12: #{tpu_custom_call.1} parent=5 // pred_fallthru
      _
    %p306 = scmp.lt.s32.totalorder %s17, 2
    // Predicated region
    $region37: #{tpu_custom_call.1} parent=5 // pred_check
      %p307 = pneg %p306
    $region38: #{tpu_custom_call.1} parent=5 // pred_check_branch
      %309 = sbr.rel (%p307) target = $region40
    $region39: #{tpu_custom_call.1} parent=5 // pred_region
      // Predicated region
      $region41: #{tpu_custom_call.1} parent=39 // pred_check
        %p310 = pneg %p37
      $region42: #{tpu_custom_call.1} parent=39 // pred_check_branch
        %312 = sbr.rel (%p310) target = $region44
      $region43: #{tpu_custom_call.1} parent=39 // pred_region
        %s313 = smul.u32 10, %s17
        %p314 = scmp.lt.s32.totalorder %s313, 19
        %s315 = scalar_select %p314, %s313, 19
        %s316 = smul.addr %s315, 8
        %s317 = scalar_lea.vmem %s0, %s316
        %s318 = smul.u32 10, %s17
      $region44: #{tpu_custom_call.1} parent=39 // pred_fallthru
        _
      // Predicated region
      $region45: #{tpu_custom_call.1} parent=39 // pred_check
        %p319 = pneg %p63
      $region46: #{tpu_custom_call.1} parent=39 // pred_check_branch
        %321 = sbr.rel (%p319) target = $region48
      $region47: #{tpu_custom_call.1} parent=39 // pred_region
        %s322 = smul.u32 10, %s17
        %p323 = scmp.lt.s32.totalorder %s322, 19
        %s324 = scalar_select %p323, %s322, 19
        %s325 = smul.addr %s324, 8
        %s326 = scalar_lea.vmem %s1, %s325
        %s327 = smul.u32 10, %s17
      $region48: #{tpu_custom_call.1} parent=39 // pred_fallthru
        _
    $region40: #{tpu_custom_call.1} parent=5 // pred_fallthru
      _
    %p328 = scmp.le.s32.totalorder 1, %s17
    %p329 = scmp.lt.s32.totalorder %s17, 3
    %p330 = pnand %p328, %p329
    %p331 = pneg %p330
    // Predicated region
    $region49: #{tpu_custom_call.1} parent=5 // pred_check
      _
    $region50: #{tpu_custom_call.1} parent=5 // pred_check_branch
      %333 = sbr.rel (%p330) target = $region52
    $region51: #{tpu_custom_call.1} parent=5 // pred_region
      %s334 = ssub.s32 %s17, 1
      %s335 = smul.u32 10, %s22
      %p336 = scmp.lt.s32.totalorder %s335, 19
      %s337 = scalar_select %p336, %s335, 19
      %s338 = smul.addr %s337, 8
      %s339 = scalar_lea.vmem %s0, %s338
      %p340 = pneg %p43
      %p341 = pneg %p40
      %s342 = smul.u32 10, %s22
      %p343 = scmp.lt.s32.totalorder %s342, 19
      %s344 = scalar_select %p343, %s342, 19
      %s345 = smul.addr %s344, 8
      %s346 = scalar_lea.vmem %s1, %s345
      %p347 = pneg %p69
      %p348 = pneg %p66
      %p349 = pneg %p90
      %p350 = pneg %p87
      %p351 = pneg %p111
      %p352 = pneg %p108
      %p353 = pneg %p132
      %p354 = pneg %p129
      %p355 = pneg %p153
      %p356 = pneg %p150
      %p357 = pneg %p174
      %p358 = pneg %p171
      %p359 = pneg %p195
      %p360 = pneg %p192
      %p361 = pneg %p221
      %p362 = pneg %p218
      %s363 = smul.u32 10, %s22
      %p364 = scmp.lt.s32.totalorder %s363, 19
      %s365 = scalar_select %p364, %s363, 19
      %s366 = smul.addr %s365, 4
      %s367 = scalar_lea.vmem %s8, %s366
      %p368 = pneg %p247
      %p369 = pneg %p244
      %s370 = smul.u32 10, %s22
      %p371 = scmp.lt.s32.totalorder %s370, 19
      %s372 = scalar_select %p371, %s370, 19
      %s373 = smul.addr %s372, 8
      %s374 = scalar_lea.vmem %s9, %s373
      %p375 = pneg %p273
      %p376 = pneg %p270
      %s377 = smul.u32 10, %s22
      %p378 = scmp.lt.s32.totalorder %s377, 19
      %s379 = scalar_select %p378, %s377, 19
      %s380 = smul.addr %s379, 8
      %s381 = scalar_lea.vmem %s10, %s380
      %s382 = smul.u32 10, %s22
      %p383 = scmp.lt.s32.totalorder %s382, 19
      %s384 = scalar_select %p383, %s382, 19
      %s385 = smul.addr %s384, 8
      %s386 = scalar_lea.vmem %s0, %s385
      %s387 = smul.u32 10, %s22
      %s388 = smul.u32 10, %s22
      %p389 = scmp.lt.s32.totalorder %s388, 19
      %s390 = scalar_select %p389, %s388, 19
      %s391 = smul.addr %s390, 8
      %s392 = scalar_lea.vmem %s1, %s391
      %s393 = smul.u32 10, %s22
      %s394 = smul.u32 10, %s22
      %p395 = scmp.lt.s32.totalorder %s394, 19
      %s396 = scalar_select %p395, %s394, 19
      %s397 = smul.addr %s396, 4
      %s398 = scalar_lea.vmem %s8, %s397
      %s399 = smul.u32 10, %s22
      %s400 = smul.u32 10, %s22
      %p401 = scmp.lt.s32.totalorder %s400, 19
      %s402 = scalar_select %p401, %s400, 19
      %s403 = smul.addr %s402, 8
      %s404 = scalar_lea.vmem %s9, %s403
      %s405 = smul.u32 10, %s22
      %s406 = smul.u32 10, %s22
      %p407 = scmp.lt.s32.totalorder %s406, 19
      %s408 = scalar_select %p407, %s406, 19
      %s409 = smul.addr %s408, 8
      %s410 = scalar_lea.vmem %s10, %s409
      %s411 = smul.u32 10, %s22
      %v413 = vld [vmem:[%s386] sm:$0xff]
      %v414 = vld [vmem:[%s386 + $0x8] sm:$0xff]
      %v415 = vld [vmem:[%s386 + $0x10] sm:$0xff]
      %v416 = vld [vmem:[%s386 + $0x18] sm:$0xff]
      %v417 = vld [vmem:[%s386 + $0x20] sm:$0xff]
      %v418 = vld [vmem:[%s386 + $0x28] sm:$0xff]
      %v419 = vld [vmem:[%s386 + $0x30] sm:$0xff]
      %v420 = vld [vmem:[%s386 + $0x38] sm:$0xff]
      %v421 = vld [vmem:[%s386 + $0x40] sm:$0xff]
      %v422 = vld [vmem:[%s386 + $0x48] sm:$0xff]
      %v423 = vpack.c.bf16 %v414, %v413
      %v424 = vpack.c.bf16 %v416, %v415
      %v425 = vpack.c.bf16 %v418, %v417
      %v426 = vpack.c.bf16 %v420, %v419
      %v427 = vpack.c.bf16 %v422, %v421
      %v428 = vld [vmem:[%s392] sm:$0xff]
      %v429 = vld [vmem:[%s392 + $0x8] sm:$0xff]
      %v430 = vld [vmem:[%s392 + $0x10] sm:$0xff]
      %v431 = vld [vmem:[%s392 + $0x18] sm:$0xff]
      %v432 = vld [vmem:[%s392 + $0x20] sm:$0xff]
      %v433 = vld [vmem:[%s392 + $0x28] sm:$0xff]
      %v434 = vld [vmem:[%s392 + $0x30] sm:$0xff]
      %v435 = vld [vmem:[%s392 + $0x38] sm:$0xff]
      %v436 = vld [vmem:[%s392 + $0x40] sm:$0xff]
      %v437 = vld [vmem:[%s392 + $0x48] sm:$0xff]
      %v438 = vadd.f32 %v413, %v428
      %v439 = vadd.f32 %v414, %v429
      %v440 = vadd.f32 %v415, %v430
      %v441 = vadd.f32 %v416, %v431
      %v442 = vadd.f32 %v417, %v432
      %v443 = vadd.f32 %v418, %v433
      %v444 = vadd.f32 %v419, %v434
      %v445 = vadd.f32 %v420, %v435
      %v446 = vadd.f32 %v421, %v436
      %v447 = vadd.f32 %v422, %v437
      %v448 = vpack.c.bf16 %v439, %v438
      %v449 = vpack.c.bf16 %v441, %v440
      %v450 = vpack.c.bf16 %v443, %v442
      %v451 = vpack.c.bf16 %v445, %v444
      %v452 = vpack.c.bf16 %v447, %v446
      %v453 = vld [vmem:[%s2] sm:$0xf]
      %v454 = vld [vmem:[%s2 + $0x4] sm:$0xf]
      %v455 = vld [vmem:[%s2 + $0x8] sm:$0xf]
      %v456 = vld [vmem:[%s2 + $0xc] sm:$0xf]
      %v457 = vld [vmem:[%s3] sm:$0x1]
      %v459 = vperm.slane %v457, 0
      %v465 = vunpack.c.l.b16 %v453
      %v466 = vunpack.c.l.b16 %v454
      %v467 = vunpack.c.l.b16 %v455
      %v468 = vunpack.c.l.b16 %v456
      %v469 = vpack.c.b16 %v466, %v465
      %v470 = vpack.c.b16 %v468, %v467
      %vm473 = vcmask 261120
      %v475 = vsel %vm473, %v423, 0
      %v478 = vsel %vm473, %v424, 0
      %v481 = vsel %vm473, %v425, 0
      %v484 = vsel %vm473, %v426, 0
      %v487 = vsel %vm473, %v427, 0
      %489 = vmatpush.bf16.msra.mxu0 0
      %490 = vmatpush.bf16.msra.mxu0 0
      %491 = vmatpush.bf16.msra.mxu0 0
      %492 = vmatpush.bf16.msra.mxu0 0
      %493 = vmatpush.bf16.msra.mxu0 0
      %494 = vmatpush.bf16.msra.mxu0 0
      %495 = vmatpush.bf16.msra.mxu0 %v470
      %496 = vmatpush.bf16.msra.mxu0 %v469
      %497 = vmatmul.bf16.gmra.mxu0 %v475
      %v498 = vpop.f32.mrf.mxu0
      %v499 = vadd.f32 %v459, %v498
      %v500 = vpop.f32.mrf.mxu0
      %v501 = vadd.f32 %v459, %v500
      %502 = vmatmul.bf16.gmra.mxu0 %v478
      %v503 = vpop.f32.mrf.mxu0
      %v504 = vadd.f32 %v459, %v503
      %v505 = vpop.f32.mrf.mxu0
      %v506 = vadd.f32 %v459, %v505
      %507 = vmatmul.bf16.gmra.mxu0 %v481
      %v508 = vpop.f32.mrf.mxu0
      %v509 = vadd.f32 %v459, %v508
      %v510 = vpop.f32.mrf.mxu0
      %v511 = vadd.f32 %v459, %v510
      %512 = vmatmul.bf16.gmra.mxu0 %v484
      %v513 = vpop.f32.mrf.mxu0
      %v514 = vadd.f32 %v459, %v513
      %v515 = vpop.f32.mrf.mxu0
      %v516 = vadd.f32 %v459, %v515
      %517 = vmatmul.bf16.gmra.mxu0 %v487
      %v518 = vpop.f32.mrf.mxu0
      %v519 = vadd.f32 %v459, %v518
      %v520 = vpop.f32.mrf.mxu0
      %v521 = vadd.f32 %v459, %v520
      %522 = vdwg.mxu0
      %v523 = vpack.c.bf16 %v499, %v499
      %v524 = vpack.c.bf16 %v501, %v501
      %v525 = vpack.c.bf16 %v504, %v504
      %v526 = vpack.c.bf16 %v506, %v506
      %v527 = vpack.c.bf16 %v509, %v509
      %v528 = vpack.c.bf16 %v511, %v511
      %v529 = vpack.c.bf16 %v514, %v514
      %v530 = vpack.c.bf16 %v516, %v516
      %v531 = vpack.c.bf16 %v519, %v519
      %v532 = vpack.c.bf16 %v521, %v521
      %vm533 = vcmask 257024
      %534 = vst.msk [vmem:[%s398] sm:$0xf] %vm533, %v523
      %535 = vst.msk [vmem:[%s398 + $0x4] sm:$0xf] %vm533, %v524
      %536 = vst.msk [vmem:[%s398 + $0x8] sm:$0xf] %vm533, %v525
      %537 = vst.msk [vmem:[%s398 + $0xc] sm:$0xf] %vm533, %v526
      %538 = vst.msk [vmem:[%s398 + $0x10] sm:$0xf] %vm533, %v527
      %539 = vst.msk [vmem:[%s398 + $0x14] sm:$0xf] %vm533, %v528
      %540 = vst.msk [vmem:[%s398 + $0x18] sm:$0xf] %vm533, %v529
      %541 = vst.msk [vmem:[%s398 + $0x1c] sm:$0xf] %vm533, %v530
      %542 = vst.msk [vmem:[%s398 + $0x20] sm:$0xf] %vm533, %v531
      %543 = vst.msk [vmem:[%s398 + $0x24] sm:$0xf] %vm533, %v532
      %v544 = vld [vmem:[%s4] sm:$0xf]
      %v545 = vld [vmem:[%s4 + $0x4] sm:$0xf]
      %v546 = vld [vmem:[%s4 + $0x8] sm:$0xf]
      %v547 = vld [vmem:[%s4 + $0xc] sm:$0xf]
      %v548 = vld [vmem:[%s5] sm:$0x1]
      %v550 = vperm.slane %v548, 0
      %v556 = vunpack.c.l.b16 %v544
      %v557 = vunpack.c.l.b16 %v545
      %v558 = vunpack.c.l.b16 %v546
      %v559 = vunpack.c.l.b16 %v547
      %v560 = vpack.c.b16 %v557, %v556
      %v561 = vpack.c.b16 %v559, %v558
      %v565 = vsel %vm473, %v448, 0
      %v568 = vsel %vm473, %v449, 0
      %v571 = vsel %vm473, %v450, 0
      %v574 = vsel %vm473, %v451, 0
      %v577 = vsel %vm473, %v452, 0
      %579 = vmatpush.bf16.msra.mxu0 0
      %580 = vmatpush.bf16.msra.mxu0 0
      %581 = vmatpush.bf16.msra.mxu0 0
      %582 = vmatpush.bf16.msra.mxu0 0
      %583 = vmatpush.bf16.msra.mxu0 0
      %584 = vmatpush.bf16.msra.mxu0 0
      %585 = vmatpush.bf16.msra.mxu0 %v561
      %586 = vmatpush.bf16.msra.mxu0 %v560
      %587 = vmatmul.bf16.gmra.mxu0 %v565
      %v588 = vpop.f32.mrf.mxu0
      %v589 = vadd.f32 %v550, %v588
      %v590 = vpop.f32.mrf.mxu0
      %v591 = vadd.f32 %v550, %v590
      %592 = vmatmul.bf16.gmra.mxu0 %v568
      %v593 = vpop.f32.mrf.mxu0
      %v594 = vadd.f32 %v550, %v593
      %v595 = vpop.f32.mrf.mxu0
      %v596 = vadd.f32 %v550, %v595
      %597 = vmatmul.bf16.gmra.mxu0 %v571
      %v598 = vpop.f32.mrf.mxu0
      %v599 = vadd.f32 %v550, %v598
      %v600 = vpop.f32.mrf.mxu0
      %v601 = vadd.f32 %v550, %v600
      %602 = vmatmul.bf16.gmra.mxu0 %v574
      %v603 = vpop.f32.mrf.mxu0
      %v604 = vadd.f32 %v550, %v603
      %v605 = vpop.f32.mrf.mxu0
      %v606 = vadd.f32 %v550, %v605
      %607 = vmatmul.bf16.gmra.mxu0 %v577
      %v608 = vpop.f32.mrf.mxu0
      %v609 = vadd.f32 %v550, %v608
      %v610 = vpop.f32.mrf.mxu0
      %v611 = vadd.f32 %v550, %v610
      %612 = vdwg.mxu0
      %613 = vst.msk [vmem:[%s404] sm:$0xff] %vm473, %v589
      %614 = vst.msk [vmem:[%s404 + $0x8] sm:$0xff] %vm473, %v591
      %615 = vst.msk [vmem:[%s404 + $0x10] sm:$0xff] %vm473, %v594
      %616 = vst.msk [vmem:[%s404 + $0x18] sm:$0xff] %vm473, %v596
      %617 = vst.msk [vmem:[%s404 + $0x20] sm:$0xff] %vm473, %v599
      %618 = vst.msk [vmem:[%s404 + $0x28] sm:$0xff] %vm473, %v601
      %619 = vst.msk [vmem:[%s404 + $0x30] sm:$0xff] %vm473, %v604
      %620 = vst.msk [vmem:[%s404 + $0x38] sm:$0xff] %vm473, %v606
      %621 = vst.msk [vmem:[%s404 + $0x40] sm:$0xff] %vm473, %v609
      %622 = vst.msk [vmem:[%s404 + $0x48] sm:$0xff] %vm473, %v611
      %v623 = vld [vmem:[%s6] sm:$0xf]
      %v624 = vld [vmem:[%s6 + $0x4] sm:$0xf]
      %v625 = vld [vmem:[%s6 + $0x8] sm:$0xf]
      %v626 = vld [vmem:[%s6 + $0xc] sm:$0xf]
      %v627 = vld [vmem:[%s7] sm:$0x1]
      %v629 = vperm.slane %v627, 0
      %v635 = vunpack.c.l.b16 %v623
      %v636 = vunpack.c.l.b16 %v624
      %v637 = vunpack.c.l.b16 %v625
      %v638 = vunpack.c.l.b16 %v626
      %v639 = vpack.c.b16 %v636, %v635
      %v640 = vpack.c.b16 %v638, %v637
      %643 = vmatpush.bf16.msra.mxu0 0
      %644 = vmatpush.bf16.msra.mxu0 0
      %645 = vmatpush.bf16.msra.mxu0 0
      %646 = vmatpush.bf16.msra.mxu0 0
      %647 = vmatpush.bf16.msra.mxu0 0
      %648 = vmatpush.bf16.msra.mxu0 0
      %649 = vmatpush.bf16.msra.mxu0 %v640
      %650 = vmatpush.bf16.msra.mxu0 %v639
      %651 = vmatmul.bf16.gmra.mxu0 %v565
      %v652 = vpop.f32.mrf.mxu0
      %v653 = vadd.f32 %v629, %v652
      %v654 = vpop.f32.mrf.mxu0
      %v655 = vadd.f32 %v629, %v654
      %656 = vmatmul.bf16.gmra.mxu0 %v568
      %v657 = vpop.f32.mrf.mxu0
      %v658 = vadd.f32 %v629, %v657
      %v659 = vpop.f32.mrf.mxu0
      %v660 = vadd.f32 %v629, %v659
      %661 = vmatmul.bf16.gmra.mxu0 %v571
      %v662 = vpop.f32.mrf.mxu0
      %v663 = vadd.f32 %v629, %v662
      %v664 = vpop.f32.mrf.mxu0
      %v665 = vadd.f32 %v629, %v664
      %666 = vmatmul.bf16.gmra.mxu0 %v574
      %v667 = vpop.f32.mrf.mxu0
      %v668 = vadd.f32 %v629, %v667
      %v669 = vpop.f32.mrf.mxu0
      %v670 = vadd.f32 %v629, %v669
      %671 = vmatmul.bf16.gmra.mxu0 %v577
      %v672 = vpop.f32.mrf.mxu0
      %v673 = vadd.f32 %v629, %v672
      %v674 = vpop.f32.mrf.mxu0
      %v675 = vadd.f32 %v629, %v674
      %676 = vdwg.mxu0
      %vm677 = vcmask 130048
      %678 = vst.msk [vmem:[%s410] sm:$0xff] %vm677, %v653
      %679 = vst.msk [vmem:[%s410 + $0x8] sm:$0xff] %vm677, %v655
      %680 = vst.msk [vmem:[%s410 + $0x10] sm:$0xff] %vm677, %v658
      %681 = vst.msk [vmem:[%s410 + $0x18] sm:$0xff] %vm677, %v660
      %682 = vst.msk [vmem:[%s410 + $0x20] sm:$0xff] %vm677, %v663
      %683 = vst.msk [vmem:[%s410 + $0x28] sm:$0xff] %vm677, %v665
      %684 = vst.msk [vmem:[%s410 + $0x30] sm:$0xff] %vm677, %v668
      %685 = vst.msk [vmem:[%s410 + $0x38] sm:$0xff] %vm677, %v670
      %686 = vst.msk [vmem:[%s410 + $0x40] sm:$0xff] %vm677, %v673
      %687 = vst.msk [vmem:[%s410 + $0x48] sm:$0xff] %vm677, %v675
      %s688 = smul.u32 10, %s22
      %p689 = scmp.lt.s32.totalorder %s688, 19
      %s690 = scalar_select %p689, %s688, 19
      %s691 = smul.addr %s690, 4
      %s692 = scalar_lea.vmem %s8, %s691
      %s693 = smul.u32 10, %s22
      %p694 = scmp.lt.s32.totalorder %s693, 19
      %s695 = scalar_select %p694, %s693, 19
      %s696 = smul.addr %s695, 8
      %s697 = scalar_lea.vmem %s9, %s696
      %s698 = smul.u32 10, %s22
      %p699 = scmp.lt.s32.totalorder %s698, 19
      %s700 = scalar_select %p699, %s698, 19
      %s701 = smul.addr %s700, 8
      %s702 = scalar_lea.vmem %s10, %s701
      // Predicated region
      $region53: #{tpu_custom_call.1} parent=51 // pred_check
        %p703 = pneg %p218
      $region54: #{tpu_custom_call.1} parent=51 // pred_check_branch
        %705 = sbr.rel (%p703) target = $region56
      $region55: #{tpu_custom_call.1} parent=51 // pred_region
        %s706 = smul.u32 10, %s22
      $region56: #{tpu_custom_call.1} parent=51 // pred_fallthru
        _
      // Predicated region
      $region57: #{tpu_custom_call.1} parent=51 // pred_check
        %p707 = pneg %p244
      $region58: #{tpu_custom_call.1} parent=51 // pred_check_branch
        %709 = sbr.rel (%p707) target = $region60
      $region59: #{tpu_custom_call.1} parent=51 // pred_region
        %s710 = smul.u32 10, %s22
      $region60: #{tpu_custom_call.1} parent=51 // pred_fallthru
        _
      // Predicated region
      $region61: #{tpu_custom_call.1} parent=51 // pred_check
        %p711 = pneg %p270
      $region62: #{tpu_custom_call.1} parent=51 // pred_check_branch
        %713 = sbr.rel (%p711) target = $region64
      $region63: #{tpu_custom_call.1} parent=51 // pred_region
        %s714 = smul.u32 10, %s22
      $region64: #{tpu_custom_call.1} parent=51 // pred_fallthru
        _
    $region52: #{tpu_custom_call.1} parent=5 // pred_fallthru
      _
    %p715 = scmp.le.s32.totalorder 2, %s17
    // Predicated region
    $region65: #{tpu_custom_call.1} parent=5 // pred_check
      %p716 = pneg %p715
    $region66: #{tpu_custom_call.1} parent=5 // pred_check_branch
      %718 = sbr.rel (%p716) target = $region68
    $region67: #{tpu_custom_call.1} parent=5 // pred_region
      %s719 = ssub.s32 %s17, 2
      // Predicated region
      $region69: #{tpu_custom_call.1} parent=67 // pred_check
        %p720 = pneg %p224
      $region70: #{tpu_custom_call.1} parent=67 // pred_check_branch
        %722 = sbr.rel (%p720) target = $region72
      $region71: #{tpu_custom_call.1} parent=67 // pred_region
        %s723 = smul.u32 10, %s23
        %p724 = scmp.lt.s32.totalorder %s723, 19
        %s725 = scalar_select %p724, %s723, 19
        %s726 = smul.addr %s725, 4
        %s727 = scalar_lea.vmem %s8, %s726
      $region72: #{tpu_custom_call.1} parent=67 // pred_fallthru
        _
      // Predicated region
      $region73: #{tpu_custom_call.1} parent=67 // pred_check
        %p728 = pneg %p250
      $region74: #{tpu_custom_call.1} parent=67 // pred_check_branch
        %730 = sbr.rel (%p728) target = $region76
      $region75: #{tpu_custom_call.1} parent=67 // pred_region
        %s731 = smul.u32 10, %s23
        %p732 = scmp.lt.s32.totalorder %s731, 19
        %s733 = scalar_select %p732, %s731, 19
        %s734 = smul.addr %s733, 8
        %s735 = scalar_lea.vmem %s9, %s734
      $region76: #{tpu_custom_call.1} parent=67 // pred_fallthru
        _
      // Predicated region
      $region77: #{tpu_custom_call.1} parent=67 // pred_check
        %p736 = pneg %p276
      $region78: #{tpu_custom_call.1} parent=67 // pred_check_branch
        %738 = sbr.rel (%p736) target = $region80
      $region79: #{tpu_custom_call.1} parent=67 // pred_region
        %s739 = smul.u32 10, %s23
        %p740 = scmp.lt.s32.totalorder %s739, 19
        %s741 = scalar_select %p740, %s739, 19
        %s742 = smul.addr %s741, 8
        %s743 = scalar_lea.vmem %s10, %s742
      $region80: #{tpu_custom_call.1} parent=67 // pred_fallthru
        _
    $region68: #{tpu_custom_call.1} parent=5 // pred_fallthru
      _
  $region6: #{tpu_custom_call.1} parent=0 // loop_footer
    %s21 = sadd.s32 1, %s17
  $region7: #{tpu_custom_call.1} parent=0 // loop_footer_branch
    %16 = sbr.rel target = $region3
  $region8: #{tpu_custom_call.1} parent=0 // loop_exit
    _

</llo_original>
